<compile_context>
chip_gen: v5e
topology: v5e:2x2
jax: 0.10.0
libtpu: 0.0.40
codegen_flags: <defaults>
</compile_context>

<pallas_src>
import functools

import jax
import jax.numpy as jnp
from jax import lax
from jax.experimental import pallas as pl
from jax.experimental.pallas import tpu as pltpu


# --------------------------------------------------------------------------
# Fused kernel: conv (im2col matmul) + bias + ReLU + global avg pool + FC
# --------------------------------------------------------------------------
def _fused_conv_pool_fc_kernel(p_ref, wc_ref, bc_ref, wf_ref, bf_ref, o_ref,
                               *, bb, thw):
    # p_ref : (bb*thw, K)  bf16  im2col patches of `bb` batch elements
    # wc_ref: (K, Cp)      bf16  conv weight (K unpadded, C_out padded to 128)
    # bc_ref: (1, Cp)      f32   conv bias (padded lanes are 0)
    # wf_ref: (Cp, Np)     bf16  FC weight (padded rows/cols are 0)
    # bf_ref: (1, Np)      f32   FC bias (padded lanes are 0)
    # o_ref : (1, bb, Np)  f32   logits for this step's bb batch elements
    cp = wc_ref.shape[1]
    y = jnp.dot(p_ref[...], wc_ref[...],
                preferred_element_type=jnp.float32)            # (bb*thw, Cp) f32
    y = jnp.maximum(y + bc_ref[...], 0.0)                      # bias + ReLU (f32)
    # Per-batch-element global average pool (thw is a multiple of 8, so the
    # reshape is a clean sublane-aligned retile).
    pooled = jnp.sum(y.reshape(bb, thw, cp), axis=1) * (1.0 / thw)   # (bb, Cp)
    # FC: bf16 MXU operands, f32 accumulation; bias added in f32.
    logits = (jnp.dot(pooled.astype(jnp.bfloat16), wf_ref[...],
                      preferred_element_type=jnp.float32)
              + bf_ref[...])                                   # (bb, Np) f32
    o_ref[...] = logits[None]


def fused_conv_pool_fc(patches, w_conv_mat, b_conv_row, w_fc_pad, b_fc_pad,
                       *, batch, thw, bb):
    """patches: (batch*thw, K) bf16 -> logits (batch, Np) f32."""
    assert batch % bb == 0
    K = patches.shape[1]
    Cp = w_conv_mat.shape[1]
    Np = w_fc_pad.shape[1]
    nb = batch // bb
    kernel = functools.partial(_fused_conv_pool_fc_kernel, bb=bb, thw=thw)
    out = pl.pallas_call(
        kernel,
        out_shape=jax.ShapeDtypeStruct((nb, bb, Np), jnp.float32),
        grid_spec=pltpu.PrefetchScalarGridSpec(
            num_scalar_prefetch=0,
            grid=(nb,),
            in_specs=[
                pl.BlockSpec((bb * thw, K), lambda i: (i, 0)),
                pl.BlockSpec((K, Cp), lambda i: (0, 0)),
                pl.BlockSpec((1, Cp), lambda i: (0, 0)),
                pl.BlockSpec((Cp, Np), lambda i: (0, 0)),
                pl.BlockSpec((1, Np), lambda i: (0, 0)),
            ],
            out_specs=pl.BlockSpec((1, bb, Np), lambda i: (i, 0, 0)),
        ),
        compiler_params=pltpu.CompilerParams(
            dimension_semantics=("parallel",)),   # independent steps -> both TCs
    )(patches, w_conv_mat, b_conv_row, w_fc_pad, b_fc_pad)
    return out.reshape(batch, Np)


# --------------------------------------------------------------------------
# Glue: channels-last im2col for 3x3x3 conv, pad=1, stride=1
# --------------------------------------------------------------------------
def im2col_3d_cl(x_cl):
    """x_cl: (B, T, H, W, C) -> (B*T*H*W, 27*C), patch order (kd, kh, kw, c).

    Layout change happens on the UNEXPANDED input; the 27x-expanded tensor is
    only concatenated along the lane axis (no big transpose).  Done in the
    caller's dtype (bf16) so the expanded tensor never exists in f32.
    """
    B, T, H, W, C = x_cl.shape
    xp = jnp.pad(x_cl, ((0, 0), (1, 1), (1, 1), (1, 1), (0, 0)))
    taps = [
        xp[:, kd:kd + T, kh:kh + H, kw:kw + W, :]
        for kd in range(3) for kh in range(3) for kw in range(3)
    ]
    p = jnp.concatenate(taps, axis=-1)                # (B, T, H, W, 27*C)
    return p.reshape(B * T * H * W, 27 * C)


def _round_up(n, m):
    return ((n + m - 1) // m) * m


def _pick_bb(batch, bb_max=8):
    """Largest divisor of `batch` <= bb_max that still leaves >= 2 grid steps
    (so v7x's two TensorCores / megacore sharding can be used)."""
    if batch <= 1:
        return 1
    best = 1
    for cand in range(1, min(bb_max, batch) + 1):
        if batch % cand == 0 and batch // cand >= 2:
            best = cand
    return best


# --------------------------------------------------------------------------
# Full model
# --------------------------------------------------------------------------
class SemiCNNPallas:
    def __init__(self, num_class=101, num_segments=1, new_length=4,
                 input_size=16, conv_channels=32, seed=0):
        self.num_class = num_class
        self.num_segments = num_segments
        self.new_length = new_length * num_segments
        self.input_size = input_size
        self.C_out = conv_channels

        k = jax.random.PRNGKey(seed)
        k1, k2, k3, k4 = jax.random.split(k, 4)
        # PyTorch-style shapes: conv (C_out, 3, 3, 3, 3); fc (num_class, C_out)
        self.w_conv = 0.05 * jax.random.normal(
            k1, (self.C_out, 3, 3, 3, 3), jnp.float32)
        self.b_conv = 0.05 * jax.random.normal(k2, (self.C_out,), jnp.float32)
        self.w_fc = 0.05 * jax.random.normal(
            k3, (num_class, self.C_out), jnp.float32)
        self.b_fc = 0.05 * jax.random.normal(k4, (num_class,), jnp.float32)

        # Pre-flatten weights for the fused Pallas kernel.
        # Conv weight flattened in (kd, kh, kw, c_in) order to match im2col;
        # C_out padded 32 -> 128 for lane-dense MXU tiles; K=81 left unpadded
        # (legal only because the block covers the full K dim).
        K = 3 * 27
        self.K = K
        self.Cp = 128                                  # do NOT widen to 256
        self.Np = _round_up(max(num_class, 128), 128)

        w_mat = jnp.transpose(self.w_conv, (2, 3, 4, 1, 0)).reshape(
            K, self.C_out)                                     # (81, 32)
        wc = jnp.zeros((K, self.Cp), jnp.float32)
        wc = wc.at[:, :self.C_out].set(w_mat)
        self.w_conv_mat = wc.astype(jnp.bfloat16)              # bf16 MXU operand

        self.b_conv_row = jnp.zeros((1, self.Cp), jnp.float32)
        self.b_conv_row = self.b_conv_row.at[0, :self.C_out].set(self.b_conv)

        wf = jnp.zeros((self.Cp, self.Np), jnp.float32)
        wf = wf.at[:self.C_out, :num_class].set(self.w_fc.T)
        self.w_fc_pad = wf.astype(jnp.bfloat16)                # bf16 MXU operand
        self.b_fc_pad = jnp.zeros((1, self.Np), jnp.float32)
        self.b_fc_pad = self.b_fc_pad.at[0, :num_class].set(self.b_fc)

    @functools.partial(jax.jit, static_argnums=0)
    def __call__(self, x):
        # ---- model_semiCNN.forward glue (matches the PyTorch reshapes) ----
        T, S = self.new_length, self.input_size
        x = x.reshape(-1, T, 3, S, S)       # view(-1, new_length, 3, H, W)
        B = x.shape[0]
        # permute(0,2,1,3,4).view(-1,3,T,H,W) followed by NCDHW->channels-last
        # is exactly (B, T, H, W, C).  Cast to bf16 BEFORE the 27x expansion.
        x_cl = jnp.transpose(x, (0, 1, 3, 4, 2)).astype(jnp.bfloat16)

        # ---- base_model (semi_c3d minimal head), fused Pallas kernel ----
        patches = im2col_3d_cl(x_cl)                            # (B*T*S*S, 81) bf16
        bb = _pick_bb(B)
        out = fused_conv_pool_fc(
            patches, self.w_conv_mat, self.b_conv_row,
            self.w_fc_pad, self.b_fc_pad,
            batch=B, thw=T * S * S, bb=bb)                      # (B, Np)
        return out[:, :self.num_class]                          # (B, num_class)

    # Pure-JAX f32 reference (for correctness check)
    def reference(self, x):
        T, S = self.new_length, self.input_size
        x = x.reshape(-1, T, 3, S, S)
        x = jnp.transpose(x, (0, 2, 1, 3, 4)).reshape(-1, 3, T, S, S)
        y = lax.conv_general_dilated(
            x, self.w_conv, window_strides=(1, 1, 1),
            padding=((1, 1), (1, 1), (1, 1)),
            dimension_numbers=("NCDHW", "OIDHW", "NCDHW"))
        y = jnp.maximum(y + self.b_conv.reshape(1, -1, 1, 1, 1), 0.0)
        pooled = jnp.mean(y, axis=(2, 3, 4))                    # (B, C_out)
        return pooled @ self.w_fc.T + self.b_fc


if __name__ == "__main__":
    model = SemiCNNPallas(num_class=101, num_segments=1, new_length=4,
                          input_size=16, conv_channels=32, seed=0)

    key = jax.random.PRNGKey(0)
    B = 2
    # Input as it would be fed to model_semiCNN (segments/frames stacked):
    x = jax.random.normal(
        key, (B, model.new_length, 3, model.input_size, model.input_size),
        jnp.float32)

    out = model(x)
    out = jax.block_until_ready(out)

    ref = model.reference(x)
    assert out.shape == (B, model.num_class), out.shape
    # bf16 MXU operands (conv patches, conv weight, FC weight, pooled acts)
    # with f32 accumulation: relaxed tolerance.
    assert jnp.allclose(out, ref, atol=5e-3, rtol=5e-3), float(
        jnp.max(jnp.abs(out - ref)))

    print("KERNEL_OK")
</pallas_src>

<mosaic_0001>
module attributes {stable_mosaic.version = 11 : i64} {
  func.func @_fused_conv_pool_fc_kernel(%arg0: i32, %arg1: memref<1024x81xbf16, #tpu.memory_space<vmem>>, %arg2: memref<81x128xbf16, #tpu.memory_space<vmem>>, %arg3: memref<1x128xf32, #tpu.memory_space<vmem>>, %arg4: memref<128x128xbf16, #tpu.memory_space<vmem>>, %arg5: memref<1x128xf32, #tpu.memory_space<vmem>>, %arg6: memref<1x1x128xf32, #tpu.memory_space<vmem>>) attributes {dimension_semantics = [#tpu.dimension_semantics<parallel>], iteration_bounds = array<i64: 2>, scalar_prefetch = 0 : i64, scratch_operands = 0 : i64, tpu.core_type = #tpu.core_type<tc>, window_params = [{transform_indices = @transform_0, window_bounds = array<i64: 1024, 81>}, {pipeline_mode = #tpu.pipeline_mode<synchronous>, transform_indices = @transform_1, window_bounds = array<i64: 81, 128>}, {pipeline_mode = #tpu.pipeline_mode<synchronous>, transform_indices = @transform_2, window_bounds = array<i64: 1, 128>}, {pipeline_mode = #tpu.pipeline_mode<synchronous>, transform_indices = @transform_3, window_bounds = array<i64: 128, 128>}, {pipeline_mode = #tpu.pipeline_mode<synchronous>, transform_indices = @transform_4, window_bounds = array<i64: 1, 128>}, {transform_indices = @transform_5, window_bounds = array<i64: 1, 1, 128>}]} {
    %c0 = arith.constant 0 : index
    %c0_0 = arith.constant 0 : index
    %0 = vector.load %arg1[%c0, %c0_0] : memref<1024x81xbf16, #tpu.memory_space<vmem>>, vector<1024x81xbf16>
    %c0_1 = arith.constant 0 : index
    %c0_2 = arith.constant 0 : index
    %1 = vector.load %arg2[%c0_1, %c0_2] : memref<81x128xbf16, #tpu.memory_space<vmem>>, vector<81x128xbf16>
    %cst = arith.constant dense<0.000000e+00> : vector<1024x128xf32>
    %2 = tpu.matmul %0, %1, %cst {dimension_numbers = #tpu.dot_dimension_numbers<[1], [0], [0], [1], [0, 0, 1, 1], [], []>} : vector<1024x81xbf16>, vector<81x128xbf16>, vector<1024x128xf32> -> vector<1024x128xf32>
    %c0_3 = arith.constant 0 : index
    %c0_4 = arith.constant 0 : index
    %3 = vector.load %arg3[%c0_3, %c0_4] : memref<1x128xf32, #tpu.memory_space<vmem>>, vector<1x128xf32>
    %4 = vector.broadcast %3 : vector<1x128xf32> to vector<1024x128xf32>
    %5 = arith.addf %2, %4 : vector<1024x128xf32>
    %cst_5 = arith.constant 0.000000e+00 : f32
    %6 = vector.broadcast %cst_5 : f32 to vector<1024x128xf32>
    %7 = arith.maximumf %5, %6 : vector<1024x128xf32>
    %8 = vector.shape_cast %7 : vector<1024x128xf32> to vector<1x1024x128xf32>
    %cst_6 = arith.constant dense<0.000000e+00> : vector<1x128xf32>
    %9 = vector.multi_reduction <add>, %8, %cst_6 [1] : vector<1x1024x128xf32> to vector<1x128xf32>
    %cst_7 = arith.constant 9.765625E-4 : f32
    %10 = vector.broadcast %cst_7 : f32 to vector<1x128xf32>
    %11 = arith.mulf %9, %10 : vector<1x128xf32>
    %12 = arith.truncf %11 : vector<1x128xf32> to vector<1x128xbf16>
    %c0_8 = arith.constant 0 : index
    %c0_9 = arith.constant 0 : index
    %13 = vector.load %arg4[%c0_8, %c0_9] : memref<128x128xbf16, #tpu.memory_space<vmem>>, vector<128x128xbf16>
    %cst_10 = arith.constant dense<0.000000e+00> : vector<1x128xf32>
    %14 = tpu.matmul %12, %13, %cst_10 {dimension_numbers = #tpu.dot_dimension_numbers<[1], [0], [0], [1], [0, 0, 1, 1], [], []>} : vector<1x128xbf16>, vector<128x128xbf16>, vector<1x128xf32> -> vector<1x128xf32>
    %c0_11 = arith.constant 0 : index
    %c0_12 = arith.constant 0 : index
    %15 = vector.load %arg5[%c0_11, %c0_12] : memref<1x128xf32, #tpu.memory_space<vmem>>, vector<1x128xf32>
    %16 = arith.addf %14, %15 : vector<1x128xf32>
    %17 = vector.shape_cast %16 : vector<1x128xf32> to vector<1x1x128xf32>
    %c0_13 = arith.constant 0 : index
    %c0_14 = arith.constant 0 : index
    %c0_15 = arith.constant 0 : index
    %18 = vector.load %arg6[%c0_13, %c0_14, %c0_15] : memref<1x1x128xf32, #tpu.memory_space<vmem>>, vector<1x1x128xf32>
    tpu.vector_store %arg6[%c0_13, %c0_14, %c0_15], %17 {strides = array<i32>} : memref<1x1x128xf32, #tpu.memory_space<vmem>>, vector<1x1x128xf32>,
    return
  }
  func.func @transform_0(%arg0: i32) -> (i32, i32) {
    %c0_i32 = arith.constant 0 : i32
    %c0_i32_0 = arith.constant 0 : i32
    return %arg0, %c0_i32 : i32, i32
  }
  func.func @transform_1(%arg0: i32) -> (i32, i32) {
    %c0_i32 = arith.constant 0 : i32
    %c0_i32_0 = arith.constant 0 : i32
    %c0_i32_1 = arith.constant 0 : i32
    return %c0_i32, %c0_i32_0 : i32, i32
  }
  func.func @transform_2(%arg0: i32) -> (i32, i32) {
    %c0_i32 = arith.constant 0 : i32
    %c0_i32_0 = arith.constant 0 : i32
    %c0_i32_1 = arith.constant 0 : i32
    return %c0_i32, %c0_i32_0 : i32, i32
  }
  func.func @transform_3(%arg0: i32) -> (i32, i32) {
    %c0_i32 = arith.constant 0 : i32
    %c0_i32_0 = arith.constant 0 : i32
    %c0_i32_1 = arith.constant 0 : i32
    return %c0_i32, %c0_i32_0 : i32, i32
  }
  func.func @transform_4(%arg0: i32) -> (i32, i32) {
    %c0_i32 = arith.constant 0 : i32
    %c0_i32_0 = arith.constant 0 : i32
    %c0_i32_1 = arith.constant 0 : i32
    return %c0_i32, %c0_i32_0 : i32, i32
  }
  func.func @transform_5(%arg0: i32) -> (i32, i32, i32) {
    %c0_i32 = arith.constant 0 : i32
    %c0_i32_0 = arith.constant 0 : i32
    %c0_i32_1 = arith.constant 0 : i32
    return %arg0, %c0_i32, %c0_i32_0 : i32, i32, i32
  }
}

</mosaic_0001>

<llo_original>
// kernel: a_call__.1
$region0: #{a_call__.1}
  #allocation0 [shape = 'u32[]', space=smem, size = 0x4, offset = 0x4, fixed_abs, tag = 'smem constant byte address 0x4 - core index']
  #allocation1 [shape = 'u32[72,128]{1,0:T(1,128)}', space=vmem, size = 0x9000, scoped, tag = 'internal scratch']
  %s0 = inlined_call_operand.vmem [shape: bf16[2048,81], index: 0, kind: input, shape index: {}]
  %s1 = inlined_call_operand.vmem [shape: bf16[81,128], index: 1, kind: input, shape index: {}]
  %s2 = inlined_call_operand.vmem [shape: f32[1,128], index: 2, kind: input, shape index: {}]
  %s3 = inlined_call_operand.vmem [shape: bf16[128,128], index: 3, kind: input, shape index: {}]
  %s4 = inlined_call_operand.vmem [shape: f32[1,128], index: 4, kind: input, shape index: {}]
  %s5 = inlined_call_operand.hbm [shape: f32[2,1,128], index: 5, kind: output, shape index: {}]
  %s6 = sld [smem:[#allocation0]]
  $region53: #{a_call__.1} parent=0
    _
  %s8 = ssub.s32 1, %s6
  %s9 = scalar_select 0, %s8, %s6
  $region1: #{a_call__.1} parent=0
    #allocation2 [shape = 'u8[1024]{0}', space=vmem, size = 0x400, scoped, tag = 'output window, operand 0']
    #allocation3 [shape = 's32[2]{0}', space=sflag, size = 0x8, scoped, tag = 'scoped memory for a_call__.1']
    %10 = vsyncpa [#allocation3], 0
    %s11 = scalar_lea.sflag [#allocation3], 1
    %12 = vsyncpa %s11, 0
    loop: start=0, step=1, limit=4
    $region2: #{a_call__.1} parent=1 // loop_pre_header
      _
    $region3: #{a_call__.1} parent=1 // loop_header
      %s14 = sphi 0, %s18
      %p15 = scmp.ge.s32.totalorder %s14, 4
      %s24 = sphi 0, %s26
      %s27 = sphi 0, %s24
      %s28 = sphi 0, %s27
      %s44 = sphi 0, %s28
      %s48 = sphi 0, %s48
      %s50 = sphi 0, %s48
      %s51 = sphi 0, %s50
      %s65 = sphi 0, %s51
      %s69 = sphi 0, %s69
      %s71 = sphi 0, %s69
      %s72 = sphi 0, %s71
      %s86 = sphi 0, %s72
      %s90 = sphi 0, %s90
      %s92 = sphi 0, %s90
      %s93 = sphi 0, %s92
      %s107 = sphi 0, %s93
      %s111 = sphi 0, %s111
      %s113 = sphi 0, %s111
      %s114 = sphi 0, %s113
      %s128 = sphi 0, %s114
      %s134 = sphi 0, %s136
      %s137 = sphi 0, %s134
      %s138 = sphi 0, %s137
      %s154 = sphi 0, %s138
    $region4: #{a_call__.1} parent=1 // loop_header_branch
      %17 = sbr.rel (%p15) target = $region8
    $region5: #{a_call__.1} parent=1 // loop_body
      %s19 = ssub.s32 %s14, 1
      %s20 = ssub.s32 %s14, 2
      %s21 = sadd.s32 %s14, 1
      %s22 = ssub.s32 %s14, %s21
      %p23 = scmp.eq.s32.totalorder %s22, 0
      %s25 = sadd.s32 %s24, 1
      %s26 = scalar_select %p23, %s24, %s25
      %p29 = pneg %p23
      %p30 = scmp.eq.s32.totalorder %s14, 1
      %p31 = por %p29, %p30
      %p32 = scmp.ne.s32.totalorder %s24, %s27
      %p33 = scmp.eq.s32.totalorder %s14, 0
      %p34 = por %p32, %p33
      %p35 = scmp.ne.s32.totalorder %s24, %s27
      %p36 = scmp.eq.s32.totalorder %s19, 1
      %p37 = por %p35, %p36
      %p38 = scmp.ne.s32.totalorder %s27, %s28
      %p39 = scmp.eq.s32.totalorder %s19, 0
      %p40 = por %p38, %p39
      %p41 = scmp.ne.s32.totalorder %s27, %s28
      %p42 = scmp.eq.s32.totalorder %s20, 1
      %p43 = por %p41, %p42
      %p45 = scmp.ne.s32.totalorder %s28, %s44
      %p46 = scmp.eq.s32.totalorder %s20, 0
      %p47 = por %p45, %p46
      %s49 = sadd.s32 %s48, 1
      %p52 = scmp.eq.s32.totalorder %s14, 1
      %p53 = scmp.ne.s32.totalorder %s48, %s50
      %p54 = scmp.eq.s32.totalorder %s14, 0
      %p55 = por %p53, %p54
      %p56 = scmp.ne.s32.totalorder %s48, %s50
      %p57 = scmp.eq.s32.totalorder %s19, 1
      %p58 = por %p56, %p57
      %p59 = scmp.ne.s32.totalorder %s50, %s51
      %p60 = scmp.eq.s32.totalorder %s19, 0
      %p61 = por %p59, %p60
      %p62 = scmp.ne.s32.totalorder %s50, %s51
      %p63 = scmp.eq.s32.totalorder %s20, 1
      %p64 = por %p62, %p63
      %p66 = scmp.ne.s32.totalorder %s51, %s65
      %p67 = scmp.eq.s32.totalorder %s20, 0
      %p68 = por %p66, %p67
      %s70 = sadd.s32 %s69, 1
      %p73 = scmp.eq.s32.totalorder %s14, 1
      %p74 = scmp.ne.s32.totalorder %s69, %s71
      %p75 = scmp.eq.s32.totalorder %s14, 0
      %p76 = por %p74, %p75
      %p77 = scmp.ne.s32.totalorder %s69, %s71
      %p78 = scmp.eq.s32.totalorder %s19, 1
      %p79 = por %p77, %p78
      %p80 = scmp.ne.s32.totalorder %s71, %s72
      %p81 = scmp.eq.s32.totalorder %s19, 0
      %p82 = por %p80, %p81
      %p83 = scmp.ne.s32.totalorder %s71, %s72
      %p84 = scmp.eq.s32.totalorder %s20, 1
      %p85 = por %p83, %p84
      %p87 = scmp.ne.s32.totalorder %s72, %s86
      %p88 = scmp.eq.s32.totalorder %s20, 0
      %p89 = por %p87, %p88
      %s91 = sadd.s32 %s90, 1
      %p94 = scmp.eq.s32.totalorder %s14, 1
      %p95 = scmp.ne.s32.totalorder %s90, %s92
      %p96 = scmp.eq.s32.totalorder %s14, 0
      %p97 = por %p95, %p96
      %p98 = scmp.ne.s32.totalorder %s90, %s92
      %p99 = scmp.eq.s32.totalorder %s19, 1
      %p100 = por %p98, %p99
      %p101 = scmp.ne.s32.totalorder %s92, %s93
      %p102 = scmp.eq.s32.totalorder %s19, 0
      %p103 = por %p101, %p102
      %p104 = scmp.ne.s32.totalorder %s92, %s93
      %p105 = scmp.eq.s32.totalorder %s20, 1
      %p106 = por %p104, %p105
      %p108 = scmp.ne.s32.totalorder %s93, %s107
      %p109 = scmp.eq.s32.totalorder %s20, 0
      %p110 = por %p108, %p109
      %s112 = sadd.s32 %s111, 1
      %p115 = scmp.eq.s32.totalorder %s14, 1
      %p116 = scmp.ne.s32.totalorder %s111, %s113
      %p117 = scmp.eq.s32.totalorder %s14, 0
      %p118 = por %p116, %p117
      %p119 = scmp.ne.s32.totalorder %s111, %s113
      %p120 = scmp.eq.s32.totalorder %s19, 1
      %p121 = por %p119, %p120
      %p122 = scmp.ne.s32.totalorder %s113, %s114
      %p123 = scmp.eq.s32.totalorder %s19, 0
      %p124 = por %p122, %p123
      %p125 = scmp.ne.s32.totalorder %s113, %s114
      %p126 = scmp.eq.s32.totalorder %s20, 1
      %p127 = por %p125, %p126
      %p129 = scmp.ne.s32.totalorder %s114, %s128
      %p130 = scmp.eq.s32.totalorder %s20, 0
      %p131 = por %p129, %p130
      %s132 = ssub.s32 %s14, %s21
      %p133 = scmp.eq.s32.totalorder %s132, 0
      %s135 = sadd.s32 %s134, 1
      %s136 = scalar_select %p133, %s134, %s135
      %p139 = pneg %p133
      %p140 = scmp.eq.s32.totalorder %s14, 1
      %p141 = por %p139, %p140
      %p142 = scmp.ne.s32.totalorder %s134, %s137
      %p143 = scmp.eq.s32.totalorder %s14, 0
      %p144 = por %p142, %p143
      %p145 = scmp.ne.s32.totalorder %s134, %s137
      %p146 = scmp.eq.s32.totalorder %s19, 1
      %p147 = por %p145, %p146
      %p148 = scmp.ne.s32.totalorder %s137, %s138
      %p149 = scmp.eq.s32.totalorder %s19, 0
      %p150 = por %p148, %p149
      %p151 = scmp.ne.s32.totalorder %s137, %s138
      %p152 = scmp.eq.s32.totalorder %s20, 1
      %p153 = por %p151, %p152
      %p155 = scmp.ne.s32.totalorder %s138, %s154
      %p156 = scmp.eq.s32.totalorder %s20, 0
      %p157 = por %p155, %p156
      %p158 = scmp.le.s32.totalorder 1, %s14
      %p159 = scmp.lt.s32.totalorder %s14, 3
      %p160 = pnand %p158, %p159
      %p161 = pneg %p160
      // Predicated region
      $region9: #{a_call__.1} parent=5 // pred_check
        _
      $region10: #{a_call__.1} parent=5 // pred_check_branch
        %163 = sbr.rel (%p160) target = $region12
      $region11: #{a_call__.1} parent=5 // pred_region
        %s164 = ssub.s32 %s14, 1
        // Predicated region
        $region13: #{a_call__.1} parent=11 // pred_check
          %p165 = pneg %p61
        $region14: #{a_call__.1} parent=11 // pred_check_branch
          %167 = sbr.rel (%p165) target = $region16
        $region15: #{a_call__.1} parent=11 // pred_region
          _
        $region16: #{a_call__.1} parent=11 // pred_fallthru
          _
        // Predicated region
        $region17: #{a_call__.1} parent=11 // pred_check
          %p168 = pneg %p82
        $region18: #{a_call__.1} parent=11 // pred_check_branch
          %170 = sbr.rel (%p168) target = $region20
        $region19: #{a_call__.1} parent=11 // pred_region
          _
        $region20: #{a_call__.1} parent=11 // pred_fallthru
          _
        // Predicated region
        $region21: #{a_call__.1} parent=11 // pred_check
          %p171 = pneg %p103
        $region22: #{a_call__.1} parent=11 // pred_check_branch
          %173 = sbr.rel (%p171) target = $region24
        $region23: #{a_call__.1} parent=11 // pred_region
          _
        $region24: #{a_call__.1} parent=11 // pred_fallthru
          _
        // Predicated region
        $region25: #{a_call__.1} parent=11 // pred_check
          %p174 = pneg %p124
        $region26: #{a_call__.1} parent=11 // pred_check_branch
          %176 = sbr.rel (%p174) target = $region28
        $region27: #{a_call__.1} parent=11 // pred_region
          _
        $region28: #{a_call__.1} parent=11 // pred_fallthru
          _
      $region12: #{a_call__.1} parent=5 // pred_fallthru
        _
      %p177 = scmp.lt.s32.totalorder %s14, 2
      // Predicated region
      $region29: #{a_call__.1} parent=5 // pred_check
        %p178 = pneg %p177
      $region30: #{a_call__.1} parent=5 // pred_check_branch
        %180 = sbr.rel (%p178) target = $region32
      $region31: #{a_call__.1} parent=5 // pred_region
        // Predicated region
        $region33: #{a_call__.1} parent=31 // pred_check
          %p181 = pneg %p34
        $region34: #{a_call__.1} parent=31 // pred_check_branch
          %183 = sbr.rel (%p181) target = $region36
        $region35: #{a_call__.1} parent=31 // pred_region
          %s184 = smul.u32 128, %s14
          %p185 = scmp.lt.s32.totalorder %s184, 255
          %s186 = scalar_select %p185, %s184, 255
          %s187 = smul.addr %s186, 4
          %s188 = scalar_lea.vmem %s0, %s187
          %s189 = smul.u32 128, %s14
        $region36: #{a_call__.1} parent=31 // pred_fallthru
          _
      $region32: #{a_call__.1} parent=5 // pred_fallthru
        _
      %p190 = scmp.le.s32.totalorder 1, %s14
      %p191 = scmp.lt.s32.totalorder %s14, 3
      %p192 = pnand %p190, %p191
      %p193 = pneg %p192
      // Predicated region
      $region37: #{a_call__.1} parent=5 // pred_check
        _
      $region38: #{a_call__.1} parent=5 // pred_check_branch
        %195 = sbr.rel (%p192) target = $region40
      $region39: #{a_call__.1} parent=5 // pred_region
        %s196 = ssub.s32 %s14, 1
        %s197 = smul.u32 128, %s19
        %p198 = scmp.lt.s32.totalorder %s197, 255
        %s199 = scalar_select %p198, %s197, 255
        %s200 = smul.addr %s199, 4
        %s201 = scalar_lea.vmem %s0, %s200
        %p202 = pneg %p40
        %p203 = pneg %p37
        %p204 = pneg %p61
        %p205 = pneg %p58
        %p206 = pneg %p82
        %p207 = pneg %p79
        %p208 = pneg %p103
        %p209 = pneg %p100
        %p210 = pneg %p124
        %p211 = pneg %p121
        %p212 = pneg %p150
        %p213 = pneg %p147
        %s214 = sand.u32 %s137, 1
        %s215 = scalar_lea.sflag [#allocation3], %s214
        %s216 = sand.u32 %s137, 1
        %s217 = scalar_lea.vmem [#allocation2], %s216
        %s218 = smul.u32 128, %s19
        %p219 = scmp.lt.s32.totalorder %s218, 255
        %s220 = scalar_select %p219, %s218, 255
        %s221 = smul.addr %s220, 4
        %s222 = scalar_lea.vmem %s0, %s221
        %s223 = smul.u32 128, %s19
        %v225 = vld [vmem:[%s222] sm:$0xf]
        %v226 = vld [vmem:[%s222 + $0x4] sm:$0xf]
        %v227 = vld [vmem:[%s222 + $0x8] sm:$0xf]
        %v228 = vld [vmem:[%s222 + $0xc] sm:$0xf]
        %v229 = vld [vmem:[%s222 + $0x10] sm:$0xf]
        %v230 = vld [vmem:[%s222 + $0x14] sm:$0xf]
        %v231 = vld [vmem:[%s222 + $0x18] sm:$0xf]
        %v232 = vld [vmem:[%s222 + $0x1c] sm:$0xf]
        %v233 = vld [vmem:[%s222 + $0x20] sm:$0xf]
        %v234 = vld [vmem:[%s222 + $0x24] sm:$0xf]
        %v235 = vld [vmem:[%s222 + $0x28] sm:$0xf]
        %v236 = vld [vmem:[%s222 + $0x2c] sm:$0xf]
        %v237 = vld [vmem:[%s222 + $0x30] sm:$0xf]
        %v238 = vld [vmem:[%s222 + $0x34] sm:$0xf]
        %v239 = vld [vmem:[%s222 + $0x38] sm:$0xf]
        %v240 = vld [vmem:[%s222 + $0x3c] sm:$0xf]
        %v241 = vld [vmem:[%s222 + $0x40] sm:$0xf]
        %v242 = vld [vmem:[%s222 + $0x44] sm:$0xf]
        %v243 = vld [vmem:[%s222 + $0x48] sm:$0xf]
        %v244 = vld [vmem:[%s222 + $0x4c] sm:$0xf]
        %v245 = vld [vmem:[%s222 + $0x50] sm:$0xf]
        %v246 = vld [vmem:[%s222 + $0x54] sm:$0xf]
        %v247 = vld [vmem:[%s222 + $0x58] sm:$0xf]
        %v248 = vld [vmem:[%s222 + $0x5c] sm:$0xf]
        %v249 = vld [vmem:[%s222 + $0x60] sm:$0xf]
        %v250 = vld [vmem:[%s222 + $0x64] sm:$0xf]
        %v251 = vld [vmem:[%s222 + $0x68] sm:$0xf]
        %v252 = vld [vmem:[%s222 + $0x6c] sm:$0xf]
        %v253 = vld [vmem:[%s222 + $0x70] sm:$0xf]
        %v254 = vld [vmem:[%s222 + $0x74] sm:$0xf]
        %v255 = vld [vmem:[%s222 + $0x78] sm:$0xf]
        %v256 = vld [vmem:[%s222 + $0x7c] sm:$0xf]
        %v257 = vld [vmem:[%s222 + $0x80] sm:$0xf]
        %v258 = vld [vmem:[%s222 + $0x84] sm:$0xf]
        %v259 = vld [vmem:[%s222 + $0x88] sm:$0xf]
        %v260 = vld [vmem:[%s222 + $0x8c] sm:$0xf]
        %v261 = vld [vmem:[%s222 + $0x90] sm:$0xf]
        %v262 = vld [vmem:[%s222 + $0x94] sm:$0xf]
        %v263 = vld [vmem:[%s222 + $0x98] sm:$0xf]
        %v264 = vld [vmem:[%s222 + $0x9c] sm:$0xf]
        %v265 = vld [vmem:[%s222 + $0xa0] sm:$0xf]
        %v266 = vld [vmem:[%s222 + $0xa4] sm:$0xf]
        %v267 = vld [vmem:[%s222 + $0xa8] sm:$0xf]
        %v268 = vld [vmem:[%s222 + $0xac] sm:$0xf]
        %v269 = vld [vmem:[%s222 + $0xb0] sm:$0xf]
        %v270 = vld [vmem:[%s222 + $0xb4] sm:$0xf]
        %v271 = vld [vmem:[%s222 + $0xb8] sm:$0xf]
        %v272 = vld [vmem:[%s222 + $0xbc] sm:$0xf]
        %v273 = vld [vmem:[%s222 + $0xc0] sm:$0xf]
        %v274 = vld [vmem:[%s222 + $0xc4] sm:$0xf]
        %v275 = vld [vmem:[%s222 + $0xc8] sm:$0xf]
        %v276 = vld [vmem:[%s222 + $0xcc] sm:$0xf]
        %v277 = vld [vmem:[%s222 + $0xd0] sm:$0xf]
        %v278 = vld [vmem:[%s222 + $0xd4] sm:$0xf]
        %v279 = vld [vmem:[%s222 + $0xd8] sm:$0xf]
        %v280 = vld [vmem:[%s222 + $0xdc] sm:$0xf]
        %v281 = vld [vmem:[%s222 + $0xe0] sm:$0xf]
        %v282 = vld [vmem:[%s222 + $0xe4] sm:$0xf]
        %v283 = vld [vmem:[%s222 + $0xe8] sm:$0xf]
        %v284 = vld [vmem:[%s222 + $0xec] sm:$0xf]
        %v285 = vld [vmem:[%s222 + $0xf0] sm:$0xf]
        %v286 = vld [vmem:[%s222 + $0xf4] sm:$0xf]
        %v287 = vld [vmem:[%s222 + $0xf8] sm:$0xf]
        %v288 = vld [vmem:[%s222 + $0xfc] sm:$0xf]
        %v289 = vld [vmem:[%s222 + $0x100] sm:$0xf]
        %v290 = vld [vmem:[%s222 + $0x104] sm:$0xf]
        %v291 = vld [vmem:[%s222 + $0x108] sm:$0xf]
        %v292 = vld [vmem:[%s222 + $0x10c] sm:$0xf]
        %v293 = vld [vmem:[%s222 + $0x110] sm:$0xf]
        %v294 = vld [vmem:[%s222 + $0x114] sm:$0xf]
        %v295 = vld [vmem:[%s222 + $0x118] sm:$0xf]
        %v296 = vld [vmem:[%s222 + $0x11c] sm:$0xf]
        %v297 = vld [vmem:[%s222 + $0x120] sm:$0xf]
        %v298 = vld [vmem:[%s222 + $0x124] sm:$0xf]
        %v299 = vld [vmem:[%s222 + $0x128] sm:$0xf]
        %v300 = vld [vmem:[%s222 + $0x12c] sm:$0xf]
        %v301 = vld [vmem:[%s222 + $0x130] sm:$0xf]
        %v302 = vld [vmem:[%s222 + $0x134] sm:$0xf]
        %v303 = vld [vmem:[%s222 + $0x138] sm:$0xf]
        %v304 = vld [vmem:[%s222 + $0x13c] sm:$0xf]
        %v305 = vld [vmem:[%s222 + $0x140] sm:$0xf]
        %v306 = vld [vmem:[%s222 + $0x144] sm:$0xf]
        %v307 = vld [vmem:[%s222 + $0x148] sm:$0xf]
        %v308 = vld [vmem:[%s222 + $0x14c] sm:$0xf]
        %v309 = vld [vmem:[%s222 + $0x150] sm:$0xf]
        %v310 = vld [vmem:[%s222 + $0x154] sm:$0xf]
        %v311 = vld [vmem:[%s222 + $0x158] sm:$0xf]
        %v312 = vld [vmem:[%s222 + $0x15c] sm:$0xf]
        %v313 = vld [vmem:[%s222 + $0x160] sm:$0xf]
        %v314 = vld [vmem:[%s222 + $0x164] sm:$0xf]
        %v315 = vld [vmem:[%s222 + $0x168] sm:$0xf]
        %v316 = vld [vmem:[%s222 + $0x16c] sm:$0xf]
        %v317 = vld [vmem:[%s222 + $0x170] sm:$0xf]
        %v318 = vld [vmem:[%s222 + $0x174] sm:$0xf]
        %v319 = vld [vmem:[%s222 + $0x178] sm:$0xf]
        %v320 = vld [vmem:[%s222 + $0x17c] sm:$0xf]
        %v321 = vld [vmem:[%s222 + $0x180] sm:$0xf]
        %v322 = vld [vmem:[%s222 + $0x184] sm:$0xf]
        %v323 = vld [vmem:[%s222 + $0x188] sm:$0xf]
        %v324 = vld [vmem:[%s222 + $0x18c] sm:$0xf]
        %v325 = vld [vmem:[%s222 + $0x190] sm:$0xf]
        %v326 = vld [vmem:[%s222 + $0x194] sm:$0xf]
        %v327 = vld [vmem:[%s222 + $0x198] sm:$0xf]
        %v328 = vld [vmem:[%s222 + $0x19c] sm:$0xf]
        %v329 = vld [vmem:[%s222 + $0x1a0] sm:$0xf]
        %v330 = vld [vmem:[%s222 + $0x1a4] sm:$0xf]
        %v331 = vld [vmem:[%s222 + $0x1a8] sm:$0xf]
        %v332 = vld [vmem:[%s222 + $0x1ac] sm:$0xf]
        %v333 = vld [vmem:[%s222 + $0x1b0] sm:$0xf]
        %v334 = vld [vmem:[%s222 + $0x1b4] sm:$0xf]
        %v335 = vld [vmem:[%s222 + $0x1b8] sm:$0xf]
        %v336 = vld [vmem:[%s222 + $0x1bc] sm:$0xf]
        %v337 = vld [vmem:[%s222 + $0x1c0] sm:$0xf]
        %v338 = vld [vmem:[%s222 + $0x1c4] sm:$0xf]
        %v339 = vld [vmem:[%s222 + $0x1c8] sm:$0xf]
        %v340 = vld [vmem:[%s222 + $0x1cc] sm:$0xf]
        %v341 = vld [vmem:[%s222 + $0x1d0] sm:$0xf]
        %v342 = vld [vmem:[%s222 + $0x1d4] sm:$0xf]
        %v343 = vld [vmem:[%s222 + $0x1d8] sm:$0xf]
        %v344 = vld [vmem:[%s222 + $0x1dc] sm:$0xf]
        %v345 = vld [vmem:[%s222 + $0x1e0] sm:$0xf]
        %v346 = vld [vmem:[%s222 + $0x1e4] sm:$0xf]
        %v347 = vld [vmem:[%s222 + $0x1e8] sm:$0xf]
        %v348 = vld [vmem:[%s222 + $0x1ec] sm:$0xf]
        %v349 = vld [vmem:[%s222 + $0x1f0] sm:$0xf]
        %v350 = vld [vmem:[%s222 + $0x1f4] sm:$0xf]
        %v351 = vld [vmem:[%s222 + $0x1f8] sm:$0xf]
        %v352 = vld [vmem:[%s222 + $0x1fc] sm:$0xf]
        %v353 = vld [vmem:[%s1] sm:$0xf]
        %v354 = vld [vmem:[%s1 + $0x4] sm:$0xf]
        %v355 = vld [vmem:[%s1 + $0x8] sm:$0xf]
        %v356 = vld [vmem:[%s1 + $0xc] sm:$0xf]
        %v357 = vld [vmem:[%s1 + $0x10] sm:$0xf]
        %v358 = vld [vmem:[%s1 + $0x14] sm:$0xf]
        %v359 = vld [vmem:[%s1 + $0x18] sm:$0xf]
        %v360 = vld [vmem:[%s1 + $0x1c] sm:$0xf]
        %v361 = vld [vmem:[%s1 + $0x20] sm:$0xf]
        %v362 = vld [vmem:[%s1 + $0x24] sm:$0xf]
        %v363 = vld [vmem:[%s1 + $0x28] sm:$0x1]
        %v364 = vld [vmem:[%s2] sm:$0x1]
        %v366 = vperm.slane %v364, 0
        %v496 = vunpack.c.l.b16 %v225
        %v497 = vunpack.c.l.b16 %v226
        %v498 = vunpack.c.l.b16 %v227
        %v499 = vunpack.c.l.b16 %v228
        %v500 = vunpack.c.l.b16 %v229
        %v501 = vunpack.c.l.b16 %v230
        %v502 = vunpack.c.l.b16 %v231
        %v503 = vunpack.c.l.b16 %v232
        %v504 = vunpack.c.l.b16 %v233
        %v505 = vunpack.c.l.b16 %v234
        %v506 = vunpack.c.l.b16 %v235
        %v507 = vunpack.c.l.b16 %v236
        %v508 = vunpack.c.l.b16 %v237
        %v509 = vunpack.c.l.b16 %v238
        %v510 = vunpack.c.l.b16 %v239
        %v511 = vunpack.c.l.b16 %v240
        %v512 = vunpack.c.l.b16 %v241
        %v513 = vunpack.c.l.b16 %v242
        %v514 = vunpack.c.l.b16 %v243
        %v515 = vunpack.c.l.b16 %v244
        %v516 = vunpack.c.l.b16 %v245
        %v517 = vunpack.c.l.b16 %v246
        %v518 = vunpack.c.l.b16 %v247
        %v519 = vunpack.c.l.b16 %v248
        %v520 = vunpack.c.l.b16 %v249
        %v521 = vunpack.c.l.b16 %v250
        %v522 = vunpack.c.l.b16 %v251
        %v523 = vunpack.c.l.b16 %v252
        %v524 = vunpack.c.l.b16 %v253
        %v525 = vunpack.c.l.b16 %v254
        %v526 = vunpack.c.l.b16 %v255
        %v527 = vunpack.c.l.b16 %v256
        %v528 = vunpack.c.l.b16 %v257
        %v529 = vunpack.c.l.b16 %v258
        %v530 = vunpack.c.l.b16 %v259
        %v531 = vunpack.c.l.b16 %v260
        %v532 = vunpack.c.l.b16 %v261
        %v533 = vunpack.c.l.b16 %v262
        %v534 = vunpack.c.l.b16 %v263
        %v535 = vunpack.c.l.b16 %v264
        %v536 = vunpack.c.l.b16 %v265
        %v537 = vunpack.c.l.b16 %v266
        %v538 = vunpack.c.l.b16 %v267
        %v539 = vunpack.c.l.b16 %v268
        %v540 = vunpack.c.l.b16 %v269
        %v541 = vunpack.c.l.b16 %v270
        %v542 = vunpack.c.l.b16 %v271
        %v543 = vunpack.c.l.b16 %v272
        %v544 = vunpack.c.l.b16 %v273
        %v545 = vunpack.c.l.b16 %v274
        %v546 = vunpack.c.l.b16 %v275
        %v547 = vunpack.c.l.b16 %v276
        %v548 = vunpack.c.l.b16 %v277
        %v549 = vunpack.c.l.b16 %v278
        %v550 = vunpack.c.l.b16 %v279
        %v551 = vunpack.c.l.b16 %v280
        %v552 = vunpack.c.l.b16 %v281
        %v553 = vunpack.c.l.b16 %v282
        %v554 = vunpack.c.l.b16 %v283
        %v555 = vunpack.c.l.b16 %v284
        %v556 = vunpack.c.l.b16 %v285
        %v557 = vunpack.c.l.b16 %v286
        %v558 = vunpack.c.l.b16 %v287
        %v559 = vunpack.c.l.b16 %v288
        %v560 = vunpack.c.l.b16 %v289
        %v561 = vunpack.c.l.b16 %v290
        %v562 = vunpack.c.l.b16 %v291
        %v563 = vunpack.c.l.b16 %v292
        %v564 = vunpack.c.l.b16 %v293
        %v565 = vunpack.c.l.b16 %v294
        %v566 = vunpack.c.l.b16 %v295
        %v567 = vunpack.c.l.b16 %v296
        %v568 = vunpack.c.l.b16 %v297
        %v569 = vunpack.c.l.b16 %v298
        %v570 = vunpack.c.l.b16 %v299
        %v571 = vunpack.c.l.b16 %v300
        %v572 = vunpack.c.l.b16 %v301
        %v573 = vunpack.c.l.b16 %v302
        %v574 = vunpack.c.l.b16 %v303
        %v575 = vunpack.c.l.b16 %v304
        %v576 = vunpack.c.l.b16 %v305
        %v577 = vunpack.c.l.b16 %v306
        %v578 = vunpack.c.l.b16 %v307
        %v579 = vunpack.c.l.b16 %v308
        %v580 = vunpack.c.l.b16 %v309
        %v581 = vunpack.c.l.b16 %v310
        %v582 = vunpack.c.l.b16 %v311
        %v583 = vunpack.c.l.b16 %v312
        %v584 = vunpack.c.l.b16 %v313
        %v585 = vunpack.c.l.b16 %v314
        %v586 = vunpack.c.l.b16 %v315
        %v587 = vunpack.c.l.b16 %v316
        %v588 = vunpack.c.l.b16 %v317
        %v589 = vunpack.c.l.b16 %v318
        %v590 = vunpack.c.l.b16 %v319
        %v591 = vunpack.c.l.b16 %v320
        %v592 = vunpack.c.l.b16 %v321
        %v593 = vunpack.c.l.b16 %v322
        %v594 = vunpack.c.l.b16 %v323
        %v595 = vunpack.c.l.b16 %v324
        %v596 = vunpack.c.l.b16 %v325
        %v597 = vunpack.c.l.b16 %v326
        %v598 = vunpack.c.l.b16 %v327
        %v599 = vunpack.c.l.b16 %v328
        %v600 = vunpack.c.l.b16 %v329
        %v601 = vunpack.c.l.b16 %v330
        %v602 = vunpack.c.l.b16 %v331
        %v603 = vunpack.c.l.b16 %v332
        %v604 = vunpack.c.l.b16 %v333
        %v605 = vunpack.c.l.b16 %v334
        %v606 = vunpack.c.l.b16 %v335
        %v607 = vunpack.c.l.b16 %v336
        %v608 = vunpack.c.l.b16 %v337
        %v609 = vunpack.c.l.b16 %v338
        %v610 = vunpack.c.l.b16 %v339
        %v611 = vunpack.c.l.b16 %v340
        %v612 = vunpack.c.l.b16 %v341
        %v613 = vunpack.c.l.b16 %v342
        %v614 = vunpack.c.l.b16 %v343
        %v615 = vunpack.c.l.b16 %v344
        %v616 = vunpack.c.l.b16 %v345
        %v617 = vunpack.c.l.b16 %v346
        %v618 = vunpack.c.l.b16 %v347
        %v619 = vunpack.c.l.b16 %v348
        %v620 = vunpack.c.l.b16 %v349
        %v621 = vunpack.c.l.b16 %v350
        %v622 = vunpack.c.l.b16 %v351
        %v623 = vunpack.c.l.b16 %v352
        %v624 = vpack.c.b16 %v497, %v496
        %v625 = vpack.c.b16 %v499, %v498
        %v626 = vpack.c.b16 %v501, %v500
        %v627 = vpack.c.b16 %v503, %v502
        %v628 = vpack.c.b16 %v505, %v504
        %v629 = vpack.c.b16 %v507, %v506
        %v630 = vpack.c.b16 %v509, %v508
        %v631 = vpack.c.b16 %v511, %v510
        %v632 = vpack.c.b16 %v513, %v512
        %v633 = vpack.c.b16 %v515, %v514
        %v634 = vpack.c.b16 %v517, %v516
        %v635 = vpack.c.b16 %v519, %v518
        %v636 = vpack.c.b16 %v521, %v520
        %v637 = vpack.c.b16 %v523, %v522
        %v638 = vpack.c.b16 %v525, %v524
        %v639 = vpack.c.b16 %v527, %v526
        %v640 = vpack.c.b16 %v529, %v528
        %v641 = vpack.c.b16 %v531, %v530
        %v642 = vpack.c.b16 %v533, %v532
        %v643 = vpack.c.b16 %v535, %v534
        %v644 = vpack.c.b16 %v537, %v536
        %v645 = vpack.c.b16 %v539, %v538
        %v646 = vpack.c.b16 %v541, %v540
        %v647 = vpack.c.b16 %v543, %v542
        %v648 = vpack.c.b16 %v545, %v544
        %v649 = vpack.c.b16 %v547, %v546
        %v650 = vpack.c.b16 %v549, %v548
        %v651 = vpack.c.b16 %v551, %v550
        %v652 = vpack.c.b16 %v553, %v552
        %v653 = vpack.c.b16 %v555, %v554
        %v654 = vpack.c.b16 %v557, %v556
        %v655 = vpack.c.b16 %v559, %v558
        %v656 = vpack.c.b16 %v561, %v560
        %v657 = vpack.c.b16 %v563, %v562
        %v658 = vpack.c.b16 %v565, %v564
        %v659 = vpack.c.b16 %v567, %v566
        %v660 = vpack.c.b16 %v569, %v568
        %v661 = vpack.c.b16 %v571, %v570
        %v662 = vpack.c.b16 %v573, %v572
        %v663 = vpack.c.b16 %v575, %v574
        %v664 = vpack.c.b16 %v577, %v576
        %v665 = vpack.c.b16 %v579, %v578
        %v666 = vpack.c.b16 %v581, %v580
        %v667 = vpack.c.b16 %v583, %v582
        %v668 = vpack.c.b16 %v585, %v584
        %v669 = vpack.c.b16 %v587, %v586
        %v670 = vpack.c.b16 %v589, %v588
        %v671 = vpack.c.b16 %v591, %v590
        %v672 = vpack.c.b16 %v593, %v592
        %v673 = vpack.c.b16 %v595, %v594
        %v674 = vpack.c.b16 %v597, %v596
        %v675 = vpack.c.b16 %v599, %v598
        %v676 = vpack.c.b16 %v601, %v600
        %v677 = vpack.c.b16 %v603, %v602
        %v678 = vpack.c.b16 %v605, %v604
        %v679 = vpack.c.b16 %v607, %v606
        %v680 = vpack.c.b16 %v609, %v608
        %v681 = vpack.c.b16 %v611, %v610
        %v682 = vpack.c.b16 %v613, %v612
        %v683 = vpack.c.b16 %v615, %v614
        %v684 = vpack.c.b16 %v617, %v616
        %v685 = vpack.c.b16 %v619, %v618
        %v686 = vpack.c.b16 %v621, %v620
        %v687 = vpack.c.b16 %v623, %v622
        %v699 = vunpack.c.l.b16 %v353
        %v700 = vunpack.c.l.b16 %v354
        %v701 = vunpack.c.l.b16 %v355
        %v702 = vunpack.c.l.b16 %v356
        %v703 = vunpack.c.l.b16 %v357
        %v704 = vunpack.c.l.b16 %v358
        %v705 = vunpack.c.l.b16 %v359
        %v706 = vunpack.c.l.b16 %v360
        %v707 = vunpack.c.l.b16 %v361
        %v708 = vunpack.c.l.b16 %v362
        %v709 = vunpack.c.l.b16 %v363
        %v710 = vpack.c.b16 %v700, %v699
        %v711 = vpack.c.b16 %v702, %v701
        %v712 = vpack.c.b16 %v704, %v703
        %v713 = vpack.c.b16 %v706, %v705
        %v714 = vpack.c.b16 %v708, %v707
        %v715 = vpack.c.b16 %v709, %v709
        %vm721 = vcmask 662528
        %v723 = vsel %vm721, %v624, 0
        %v726 = vsel %vm721, %v625, 0
        %v729 = vsel %vm721, %v626, 0
        %v732 = vsel %vm721, %v627, 0
        %v735 = vsel %vm721, %v628, 0
        %v738 = vsel %vm721, %v629, 0
        %v741 = vsel %vm721, %v630, 0
        %v744 = vsel %vm721, %v631, 0
        %v747 = vsel %vm721, %v632, 0
        %v750 = vsel %vm721, %v633, 0
        %v753 = vsel %vm721, %v634, 0
        %v756 = vsel %vm721, %v635, 0
        %v759 = vsel %vm721, %v636, 0
        %v762 = vsel %vm721, %v637, 0
        %v765 = vsel %vm721, %v638, 0
        %v768 = vsel %vm721, %v639, 0
        %v771 = vsel %vm721, %v640, 0
        %v774 = vsel %vm721, %v641, 0
        %v777 = vsel %vm721, %v642, 0
        %v780 = vsel %vm721, %v643, 0
        %v783 = vsel %vm721, %v644, 0
        %v786 = vsel %vm721, %v645, 0
        %v789 = vsel %vm721, %v646, 0
        %v792 = vsel %vm721, %v647, 0
        %v795 = vsel %vm721, %v648, 0
        %v798 = vsel %vm721, %v649, 0
        %v801 = vsel %vm721, %v650, 0
        %v804 = vsel %vm721, %v651, 0
        %v807 = vsel %vm721, %v652, 0
        %v810 = vsel %vm721, %v653, 0
        %v813 = vsel %vm721, %v654, 0
        %v816 = vsel %vm721, %v655, 0
        %v819 = vsel %vm721, %v656, 0
        %v822 = vsel %vm721, %v657, 0
        %v825 = vsel %vm721, %v658, 0
        %v828 = vsel %vm721, %v659, 0
        %v831 = vsel %vm721, %v660, 0
        %v834 = vsel %vm721, %v661, 0
        %v837 = vsel %vm721, %v662, 0
        %v840 = vsel %vm721, %v663, 0
        %v843 = vsel %vm721, %v664, 0
        %v846 = vsel %vm721, %v665, 0
        %v849 = vsel %vm721, %v666, 0
        %v852 = vsel %vm721, %v667, 0
        %v855 = vsel %vm721, %v668, 0
        %v858 = vsel %vm721, %v669, 0
        %v861 = vsel %vm721, %v670, 0
        %v864 = vsel %vm721, %v671, 0
        %v867 = vsel %vm721, %v672, 0
        %v870 = vsel %vm721, %v673, 0
        %v873 = vsel %vm721, %v674, 0
        %v876 = vsel %vm721, %v675, 0
        %v879 = vsel %vm721, %v676, 0
        %v882 = vsel %vm721, %v677, 0
        %v885 = vsel %vm721, %v678, 0
        %v888 = vsel %vm721, %v679, 0
        %v891 = vsel %vm721, %v680, 0
        %v894 = vsel %vm721, %v681, 0
        %v897 = vsel %vm721, %v682, 0
        %v900 = vsel %vm721, %v683, 0
        %v903 = vsel %vm721, %v684, 0
        %v906 = vsel %vm721, %v685, 0
        %v909 = vsel %vm721, %v686, 0
        %v912 = vsel %vm721, %v687, 0
        %vm914 = vcmask 1040384
        %v915 = vsel 0, 4294967295, 65535
        %v916 = vsel %vm914, %v915, 0
        %v918 = vand.u32 %v715, %v916
        %920 = vmatpush.bf16.msra.mxu0 0
        %921 = vmatpush.bf16.msra.mxu0 0
        %922 = vmatpush.bf16.msra.mxu0 %v918
        %923 = vmatpush.bf16.msra.mxu0 %v714
        %924 = vmatpush.bf16.msra.mxu0 %v713
        %925 = vmatpush.bf16.msra.mxu0 %v712
        %926 = vmatpush.bf16.msra.mxu0 %v711
        %927 = vmatpush.bf16.msra.mxu0 %v710
        %928 = vmatmul.bf16.gmra.mxu0 %v723
        %v929 = vpop.f32.mrf.mxu0
        %v930 = vadd.f32 %v366, %v929
        %v931 = vpop.f32.mrf.mxu0
        %v932 = vadd.f32 %v366, %v931
        %933 = vmatmul.bf16.gmra.mxu0 %v726
        %v934 = vpop.f32.mrf.mxu0
        %v935 = vadd.f32 %v366, %v934
        %v936 = vpop.f32.mrf.mxu0
        %v937 = vadd.f32 %v366, %v936
        %938 = vmatmul.bf16.gmra.mxu0 %v729
        %v939 = vpop.f32.mrf.mxu0
        %v940 = vadd.f32 %v366, %v939
        %v941 = vpop.f32.mrf.mxu0
        %v942 = vadd.f32 %v366, %v941
        %943 = vmatmul.bf16.gmra.mxu0 %v732
        %v944 = vpop.f32.mrf.mxu0
        %v945 = vadd.f32 %v366, %v944
        %v946 = vpop.f32.mrf.mxu0
        %v947 = vadd.f32 %v366, %v946
        %948 = vmatmul.bf16.gmra.mxu0 %v735
        %v949 = vpop.f32.mrf.mxu0
        %v950 = vadd.f32 %v366, %v949
        %v951 = vpop.f32.mrf.mxu0
        %v952 = vadd.f32 %v366, %v951
        %953 = vmatmul.bf16.gmra.mxu0 %v738
        %v954 = vpop.f32.mrf.mxu0
        %v955 = vadd.f32 %v366, %v954
        %v956 = vpop.f32.mrf.mxu0
        %v957 = vadd.f32 %v366, %v956
        %958 = vmatmul.bf16.gmra.mxu0 %v741
        %v959 = vpop.f32.mrf.mxu0
        %v960 = vadd.f32 %v366, %v959
        %v961 = vpop.f32.mrf.mxu0
        %v962 = vadd.f32 %v366, %v961
        %963 = vmatmul.bf16.gmra.mxu0 %v744
        %v964 = vpop.f32.mrf.mxu0
        %v965 = vadd.f32 %v366, %v964
        %v966 = vpop.f32.mrf.mxu0
        %v967 = vadd.f32 %v366, %v966
        %968 = vmatmul.bf16.gmra.mxu0 %v747
        %v969 = vpop.f32.mrf.mxu0
        %v970 = vadd.f32 %v366, %v969
        %v971 = vpop.f32.mrf.mxu0
        %v972 = vadd.f32 %v366, %v971
        %973 = vmatmul.bf16.gmra.mxu0 %v750
        %v974 = vpop.f32.mrf.mxu0
        %v975 = vadd.f32 %v366, %v974
        %v976 = vpop.f32.mrf.mxu0
        %v977 = vadd.f32 %v366, %v976
        %978 = vmatmul.bf16.gmra.mxu0 %v753
        %v979 = vpop.f32.mrf.mxu0
        %v980 = vadd.f32 %v366, %v979
        %v981 = vpop.f32.mrf.mxu0
        %v982 = vadd.f32 %v366, %v981
        %983 = vmatmul.bf16.gmra.mxu0 %v756
        %v984 = vpop.f32.mrf.mxu0
        %v985 = vadd.f32 %v366, %v984
        %v986 = vpop.f32.mrf.mxu0
        %v987 = vadd.f32 %v366, %v986
        %988 = vmatmul.bf16.gmra.mxu0 %v759
        %v989 = vpop.f32.mrf.mxu0
        %v990 = vadd.f32 %v366, %v989
        %v991 = vpop.f32.mrf.mxu0
        %v992 = vadd.f32 %v366, %v991
        %993 = vmatmul.bf16.gmra.mxu0 %v762
        %v994 = vpop.f32.mrf.mxu0
        %v995 = vadd.f32 %v366, %v994
        %v996 = vpop.f32.mrf.mxu0
        %v997 = vadd.f32 %v366, %v996
        %998 = vmatmul.bf16.gmra.mxu0 %v765
        %v999 = vpop.f32.mrf.mxu0
        %v1000 = vadd.f32 %v366, %v999
        %v1001 = vpop.f32.mrf.mxu0
        %v1002 = vadd.f32 %v366, %v1001
        %1003 = vmatmul.bf16.gmra.mxu0 %v768
        %v1004 = vpop.f32.mrf.mxu0
        %v1005 = vadd.f32 %v366, %v1004
        %v1006 = vpop.f32.mrf.mxu0
        %v1007 = vadd.f32 %v366, %v1006
        %1008 = vmatmul.bf16.gmra.mxu0 %v771
        %v1009 = vpop.f32.mrf.mxu0
        %v1010 = vadd.f32 %v366, %v1009
        %v1011 = vpop.f32.mrf.mxu0
        %v1012 = vadd.f32 %v366, %v1011
        %1013 = vmatmul.bf16.gmra.mxu0 %v774
        %v1014 = vpop.f32.mrf.mxu0
        %v1015 = vadd.f32 %v366, %v1014
        %v1016 = vpop.f32.mrf.mxu0
        %v1017 = vadd.f32 %v366, %v1016
        %1018 = vmatmul.bf16.gmra.mxu0 %v777
        %v1019 = vpop.f32.mrf.mxu0
        %v1020 = vadd.f32 %v366, %v1019
        %v1021 = vpop.f32.mrf.mxu0
        %v1022 = vadd.f32 %v366, %v1021
        %1023 = vmatmul.bf16.gmra.mxu0 %v780
        %v1024 = vpop.f32.mrf.mxu0
        %v1025 = vadd.f32 %v366, %v1024
        %v1026 = vpop.f32.mrf.mxu0
        %v1027 = vadd.f32 %v366, %v1026
        %1028 = vmatmul.bf16.gmra.mxu0 %v783
        %v1029 = vpop.f32.mrf.mxu0
        %v1030 = vadd.f32 %v366, %v1029
        %v1031 = vpop.f32.mrf.mxu0
        %v1032 = vadd.f32 %v366, %v1031
        %1033 = vmatmul.bf16.gmra.mxu0 %v786
        %v1034 = vpop.f32.mrf.mxu0
        %v1035 = vadd.f32 %v366, %v1034
        %v1036 = vpop.f32.mrf.mxu0
        %v1037 = vadd.f32 %v366, %v1036
        %1038 = vmatmul.bf16.gmra.mxu0 %v789
        %v1039 = vpop.f32.mrf.mxu0
        %v1040 = vadd.f32 %v366, %v1039
        %v1041 = vpop.f32.mrf.mxu0
        %v1042 = vadd.f32 %v366, %v1041
        %1043 = vmatmul.bf16.gmra.mxu0 %v792
        %v1044 = vpop.f32.mrf.mxu0
        %v1045 = vadd.f32 %v366, %v1044
        %v1046 = vpop.f32.mrf.mxu0
        %v1047 = vadd.f32 %v366, %v1046
        %1048 = vmatmul.bf16.gmra.mxu0 %v795
        %v1049 = vpop.f32.mrf.mxu0
        %v1050 = vadd.f32 %v366, %v1049
        %v1051 = vpop.f32.mrf.mxu0
        %v1052 = vadd.f32 %v366, %v1051
        %1053 = vmatmul.bf16.gmra.mxu0 %v798
        %v1054 = vpop.f32.mrf.mxu0
        %v1055 = vadd.f32 %v366, %v1054
        %v1056 = vpop.f32.mrf.mxu0
        %v1057 = vadd.f32 %v366, %v1056
        %1058 = vmatmul.bf16.gmra.mxu0 %v801
        %v1059 = vpop.f32.mrf.mxu0
        %v1060 = vadd.f32 %v366, %v1059
        %v1061 = vpop.f32.mrf.mxu0
        %v1062 = vadd.f32 %v366, %v1061
        %1063 = vmatmul.bf16.gmra.mxu0 %v804
        %v1064 = vpop.f32.mrf.mxu0
        %v1065 = vadd.f32 %v366, %v1064
        %v1066 = vpop.f32.mrf.mxu0
        %v1067 = vadd.f32 %v366, %v1066
        %1068 = vmatmul.bf16.gmra.mxu0 %v807
        %v1069 = vpop.f32.mrf.mxu0
        %v1070 = vadd.f32 %v366, %v1069
        %v1071 = vpop.f32.mrf.mxu0
        %v1072 = vadd.f32 %v366, %v1071
        %1073 = vmatmul.bf16.gmra.mxu0 %v810
        %v1074 = vpop.f32.mrf.mxu0
        %v1075 = vadd.f32 %v366, %v1074
        %v1076 = vpop.f32.mrf.mxu0
        %v1077 = vadd.f32 %v366, %v1076
        %1078 = vmatmul.bf16.gmra.mxu0 %v813
        %v1079 = vpop.f32.mrf.mxu0
        %v1080 = vadd.f32 %v366, %v1079
        %v1081 = vpop.f32.mrf.mxu0
        %v1082 = vadd.f32 %v366, %v1081
        %1083 = vmatmul.bf16.gmra.mxu0 %v816
        %v1084 = vpop.f32.mrf.mxu0
        %v1085 = vadd.f32 %v366, %v1084
        %v1086 = vpop.f32.mrf.mxu0
        %v1087 = vadd.f32 %v366, %v1086
        %1088 = vmatmul.bf16.gmra.mxu0 %v819
        %v1089 = vpop.f32.mrf.mxu0
        %v1090 = vadd.f32 %v366, %v1089
        %v1091 = vpop.f32.mrf.mxu0
        %v1092 = vadd.f32 %v366, %v1091
        %1093 = vmatmul.bf16.gmra.mxu0 %v822
        %v1094 = vpop.f32.mrf.mxu0
        %v1095 = vadd.f32 %v366, %v1094
        %v1096 = vpop.f32.mrf.mxu0
        %v1097 = vadd.f32 %v366, %v1096
        %1098 = vmatmul.bf16.gmra.mxu0 %v825
        %v1099 = vpop.f32.mrf.mxu0
        %v1100 = vadd.f32 %v366, %v1099
        %v1101 = vpop.f32.mrf.mxu0
        %v1102 = vadd.f32 %v366, %v1101
        %1103 = vmatmul.bf16.gmra.mxu0 %v828
        %v1104 = vpop.f32.mrf.mxu0
        %v1105 = vadd.f32 %v366, %v1104
        %v1106 = vpop.f32.mrf.mxu0
        %v1107 = vadd.f32 %v366, %v1106
        %1108 = vmatmul.bf16.gmra.mxu0 %v831
        %v1109 = vpop.f32.mrf.mxu0
        %v1110 = vadd.f32 %v366, %v1109
        %v1111 = vpop.f32.mrf.mxu0
        %v1112 = vadd.f32 %v366, %v1111
        %1113 = vmatmul.bf16.gmra.mxu0 %v834
        %v1114 = vpop.f32.mrf.mxu0
        %v1115 = vadd.f32 %v366, %v1114
        %v1116 = vpop.f32.mrf.mxu0
        %v1117 = vadd.f32 %v366, %v1116
        %1118 = vmatmul.bf16.gmra.mxu0 %v837
        %v1119 = vpop.f32.mrf.mxu0
        %v1120 = vadd.f32 %v366, %v1119
        %v1121 = vpop.f32.mrf.mxu0
        %v1122 = vadd.f32 %v366, %v1121
        %1123 = vmatmul.bf16.gmra.mxu0 %v840
        %v1124 = vpop.f32.mrf.mxu0
        %v1125 = vadd.f32 %v366, %v1124
        %v1126 = vpop.f32.mrf.mxu0
        %v1127 = vadd.f32 %v366, %v1126
        %1128 = vmatmul.bf16.gmra.mxu0 %v843
        %v1129 = vpop.f32.mrf.mxu0
        %v1130 = vadd.f32 %v366, %v1129
        %v1131 = vpop.f32.mrf.mxu0
        %v1132 = vadd.f32 %v366, %v1131
        %1133 = vmatmul.bf16.gmra.mxu0 %v846
        %v1134 = vpop.f32.mrf.mxu0
        %v1135 = vadd.f32 %v366, %v1134
        %v1136 = vpop.f32.mrf.mxu0
        %v1137 = vadd.f32 %v366, %v1136
        %1138 = vmatmul.bf16.gmra.mxu0 %v849
        %v1139 = vpop.f32.mrf.mxu0
        %v1140 = vadd.f32 %v366, %v1139
        %v1141 = vpop.f32.mrf.mxu0
        %v1142 = vadd.f32 %v366, %v1141
        %1143 = vmatmul.bf16.gmra.mxu0 %v852
        %v1144 = vpop.f32.mrf.mxu0
        %v1145 = vadd.f32 %v366, %v1144
        %v1146 = vpop.f32.mrf.mxu0
        %v1147 = vadd.f32 %v366, %v1146
        %1148 = vmatmul.bf16.gmra.mxu0 %v855
        %v1149 = vpop.f32.mrf.mxu0
        %v1150 = vadd.f32 %v366, %v1149
        %v1151 = vpop.f32.mrf.mxu0
        %v1152 = vadd.f32 %v366, %v1151
        %1153 = vmatmul.bf16.gmra.mxu0 %v858
        %v1154 = vpop.f32.mrf.mxu0
        %v1155 = vadd.f32 %v366, %v1154
        %v1156 = vpop.f32.mrf.mxu0
        %v1157 = vadd.f32 %v366, %v1156
        %1158 = vmatmul.bf16.gmra.mxu0 %v861
        %v1159 = vpop.f32.mrf.mxu0
        %v1160 = vadd.f32 %v366, %v1159
        %v1161 = vpop.f32.mrf.mxu0
        %v1162 = vadd.f32 %v366, %v1161
        %1163 = vmatmul.bf16.gmra.mxu0 %v864
        %v1164 = vpop.f32.mrf.mxu0
        %v1165 = vadd.f32 %v366, %v1164
        %v1166 = vpop.f32.mrf.mxu0
        %v1167 = vadd.f32 %v366, %v1166
        %1168 = vmatmul.bf16.gmra.mxu0 %v867
        %v1169 = vpop.f32.mrf.mxu0
        %v1170 = vadd.f32 %v366, %v1169
        %v1171 = vpop.f32.mrf.mxu0
        %v1172 = vadd.f32 %v366, %v1171
        %1173 = vmatmul.bf16.gmra.mxu0 %v870
        %v1174 = vpop.f32.mrf.mxu0
        %v1175 = vadd.f32 %v366, %v1174
        %v1176 = vpop.f32.mrf.mxu0
        %v1177 = vadd.f32 %v366, %v1176
        %1178 = vmatmul.bf16.gmra.mxu0 %v873
        %v1179 = vpop.f32.mrf.mxu0
        %v1180 = vadd.f32 %v366, %v1179
        %v1181 = vpop.f32.mrf.mxu0
        %v1182 = vadd.f32 %v366, %v1181
        %1183 = vmatmul.bf16.gmra.mxu0 %v876
        %v1184 = vpop.f32.mrf.mxu0
        %v1185 = vadd.f32 %v366, %v1184
        %v1186 = vpop.f32.mrf.mxu0
        %v1187 = vadd.f32 %v366, %v1186
        %1188 = vmatmul.bf16.gmra.mxu0 %v879
        %v1189 = vpop.f32.mrf.mxu0
        %v1190 = vadd.f32 %v366, %v1189
        %v1191 = vpop.f32.mrf.mxu0
        %v1192 = vadd.f32 %v366, %v1191
        %1193 = vmatmul.bf16.gmra.mxu0 %v882
        %v1194 = vpop.f32.mrf.mxu0
        %v1195 = vadd.f32 %v366, %v1194
        %v1196 = vpop.f32.mrf.mxu0
        %v1197 = vadd.f32 %v366, %v1196
        %1198 = vmatmul.bf16.gmra.mxu0 %v885
        %v1199 = vpop.f32.mrf.mxu0
        %v1200 = vadd.f32 %v366, %v1199
        %v1201 = vpop.f32.mrf.mxu0
        %v1202 = vadd.f32 %v366, %v1201
        %1203 = vmatmul.bf16.gmra.mxu0 %v888
        %v1204 = vpop.f32.mrf.mxu0
        %v1205 = vadd.f32 %v366, %v1204
        %v1206 = vpop.f32.mrf.mxu0
        %v1207 = vadd.f32 %v366, %v1206
        %1208 = vmatmul.bf16.gmra.mxu0 %v891
        %v1209 = vpop.f32.mrf.mxu0
        %v1210 = vadd.f32 %v366, %v1209
        %v1211 = vpop.f32.mrf.mxu0
        %v1212 = vadd.f32 %v366, %v1211
        %1213 = vmatmul.bf16.gmra.mxu0 %v894
        %v1214 = vpop.f32.mrf.mxu0
        %v1215 = vadd.f32 %v366, %v1214
        %v1216 = vpop.f32.mrf.mxu0
        %v1217 = vadd.f32 %v366, %v1216
        %1218 = vmatmul.bf16.gmra.mxu0 %v897
        %v1219 = vpop.f32.mrf.mxu0
        %v1220 = vadd.f32 %v366, %v1219
        %v1221 = vpop.f32.mrf.mxu0
        %v1222 = vadd.f32 %v366, %v1221
        %1223 = vmatmul.bf16.gmra.mxu0 %v900
        %v1224 = vpop.f32.mrf.mxu0
        %v1225 = vadd.f32 %v366, %v1224
        %v1226 = vpop.f32.mrf.mxu0
        %v1227 = vadd.f32 %v366, %v1226
        %1228 = vmatmul.bf16.gmra.mxu0 %v903
        %v1229 = vpop.f32.mrf.mxu0
        %v1230 = vadd.f32 %v366, %v1229
        %v1231 = vpop.f32.mrf.mxu0
        %v1232 = vadd.f32 %v366, %v1231
        %1233 = vmatmul.bf16.gmra.mxu0 %v906
        %v1234 = vpop.f32.mrf.mxu0
        %v1235 = vadd.f32 %v366, %v1234
        %v1236 = vpop.f32.mrf.mxu0
        %v1237 = vadd.f32 %v366, %v1236
        %1238 = vmatmul.bf16.gmra.mxu0 %v909
        %v1239 = vpop.f32.mrf.mxu0
        %v1240 = vadd.f32 %v366, %v1239
        %v1241 = vpop.f32.mrf.mxu0
        %v1242 = vadd.f32 %v366, %v1241
        %1243 = vmatmul.bf16.gmra.mxu0 %v912
        %v1244 = vpop.f32.mrf.mxu0
        %v1245 = vadd.f32 %v366, %v1244
        %v1246 = vpop.f32.mrf.mxu0
        %v1247 = vadd.f32 %v366, %v1246
        %1248 = vdwg.mxu0
        %v1249 = vmax.f32 %v930, 0.0
        %v1250 = vmax.f32 %v932, 0.0
        %v1251 = vmax.f32 %v935, 0.0
        %v1252 = vmax.f32 %v937, 0.0
        %v1253 = vmax.f32 %v940, 0.0
        %v1254 = vmax.f32 %v942, 0.0
        %v1255 = vmax.f32 %v945, 0.0
        %v1256 = vmax.f32 %v947, 0.0
        %v1257 = vmax.f32 %v950, 0.0
        %v1258 = vmax.f32 %v952, 0.0
        %v1259 = vmax.f32 %v955, 0.0
        %v1260 = vmax.f32 %v957, 0.0
        %v1261 = vmax.f32 %v960, 0.0
        %v1262 = vmax.f32 %v962, 0.0
        %v1263 = vmax.f32 %v965, 0.0
        %v1264 = vmax.f32 %v967, 0.0
        %v1265 = vmax.f32 %v970, 0.0
        %v1266 = vmax.f32 %v972, 0.0
        %v1267 = vmax.f32 %v975, 0.0
        %v1268 = vmax.f32 %v977, 0.0
        %v1269 = vmax.f32 %v980, 0.0
        %v1270 = vmax.f32 %v982, 0.0
        %v1271 = vmax.f32 %v985, 0.0
        %v1272 = vmax.f32 %v987, 0.0
        %v1273 = vmax.f32 %v990, 0.0
        %v1274 = vmax.f32 %v992, 0.0
        %v1275 = vmax.f32 %v995, 0.0
        %v1276 = vmax.f32 %v997, 0.0
        %v1277 = vmax.f32 %v1000, 0.0
        %v1278 = vmax.f32 %v1002, 0.0
        %v1279 = vmax.f32 %v1005, 0.0
        %v1280 = vmax.f32 %v1007, 0.0
        %v1281 = vmax.f32 %v1010, 0.0
        %v1282 = vmax.f32 %v1012, 0.0
        %v1283 = vmax.f32 %v1015, 0.0
        %v1284 = vmax.f32 %v1017, 0.0
        %v1285 = vmax.f32 %v1020, 0.0
        %v1286 = vmax.f32 %v1022, 0.0
        %v1287 = vmax.f32 %v1025, 0.0
        %v1288 = vmax.f32 %v1027, 0.0
        %v1289 = vmax.f32 %v1030, 0.0
        %v1290 = vmax.f32 %v1032, 0.0
        %v1291 = vmax.f32 %v1035, 0.0
        %v1292 = vmax.f32 %v1037, 0.0
        %v1293 = vmax.f32 %v1040, 0.0
        %v1294 = vmax.f32 %v1042, 0.0
        %v1295 = vmax.f32 %v1045, 0.0
        %v1296 = vmax.f32 %v1047, 0.0
        %v1297 = vmax.f32 %v1050, 0.0
        %v1298 = vmax.f32 %v1052, 0.0
        %v1299 = vmax.f32 %v1055, 0.0
        %v1300 = vmax.f32 %v1057, 0.0
        %v1301 = vmax.f32 %v1060, 0.0
        %v1302 = vmax.f32 %v1062, 0.0
        %v1303 = vmax.f32 %v1065, 0.0
        %v1304 = vmax.f32 %v1067, 0.0
        %v1305 = vmax.f32 %v1070, 0.0
        %v1306 = vmax.f32 %v1072, 0.0
        %v1307 = vmax.f32 %v1075, 0.0
        %v1308 = vmax.f32 %v1077, 0.0
        %v1309 = vmax.f32 %v1080, 0.0
        %v1310 = vmax.f32 %v1082, 0.0
        %v1311 = vmax.f32 %v1085, 0.0
        %v1312 = vmax.f32 %v1087, 0.0
        %v1313 = vmax.f32 %v1090, 0.0
        %v1314 = vmax.f32 %v1092, 0.0
        %v1315 = vmax.f32 %v1095, 0.0
        %v1316 = vmax.f32 %v1097, 0.0
        %v1317 = vmax.f32 %v1100, 0.0
        %v1318 = vmax.f32 %v1102, 0.0
        %v1319 = vmax.f32 %v1105, 0.0
        %v1320 = vmax.f32 %v1107, 0.0
        %v1321 = vmax.f32 %v1110, 0.0
        %v1322 = vmax.f32 %v1112, 0.0
        %v1323 = vmax.f32 %v1115, 0.0
        %v1324 = vmax.f32 %v1117, 0.0
        %v1325 = vmax.f32 %v1120, 0.0
        %v1326 = vmax.f32 %v1122, 0.0
        %v1327 = vmax.f32 %v1125, 0.0
        %v1328 = vmax.f32 %v1127, 0.0
        %v1329 = vmax.f32 %v1130, 0.0
        %v1330 = vmax.f32 %v1132, 0.0
        %v1331 = vmax.f32 %v1135, 0.0
        %v1332 = vmax.f32 %v1137, 0.0
        %v1333 = vmax.f32 %v1140, 0.0
        %v1334 = vmax.f32 %v1142, 0.0
        %v1335 = vmax.f32 %v1145, 0.0
        %v1336 = vmax.f32 %v1147, 0.0
        %v1337 = vmax.f32 %v1150, 0.0
        %v1338 = vmax.f32 %v1152, 0.0
        %v1339 = vmax.f32 %v1155, 0.0
        %v1340 = vmax.f32 %v1157, 0.0
        %v1341 = vmax.f32 %v1160, 0.0
        %v1342 = vmax.f32 %v1162, 0.0
        %v1343 = vmax.f32 %v1165, 0.0
        %v1344 = vmax.f32 %v1167, 0.0
        %v1345 = vmax.f32 %v1170, 0.0
        %v1346 = vmax.f32 %v1172, 0.0
        %v1347 = vmax.f32 %v1175, 0.0
        %v1348 = vmax.f32 %v1177, 0.0
        %v1349 = vmax.f32 %v1180, 0.0
        %v1350 = vmax.f32 %v1182, 0.0
        %v1351 = vmax.f32 %v1185, 0.0
        %v1352 = vmax.f32 %v1187, 0.0
        %v1353 = vmax.f32 %v1190, 0.0
        %v1354 = vmax.f32 %v1192, 0.0
        %v1355 = vmax.f32 %v1195, 0.0
        %v1356 = vmax.f32 %v1197, 0.0
        %v1357 = vmax.f32 %v1200, 0.0
        %v1358 = vmax.f32 %v1202, 0.0
        %v1359 = vmax.f32 %v1205, 0.0
        %v1360 = vmax.f32 %v1207, 0.0
        %v1361 = vmax.f32 %v1210, 0.0
        %v1362 = vmax.f32 %v1212, 0.0
        %v1363 = vmax.f32 %v1215, 0.0
        %v1364 = vmax.f32 %v1217, 0.0
        %v1365 = vmax.f32 %v1220, 0.0
        %v1366 = vmax.f32 %v1222, 0.0
        %v1367 = vmax.f32 %v1225, 0.0
        %v1368 = vmax.f32 %v1227, 0.0
        %v1369 = vmax.f32 %v1230, 0.0
        %v1370 = vmax.f32 %v1232, 0.0
        %v1371 = vmax.f32 %v1235, 0.0
        %v1372 = vmax.f32 %v1237, 0.0
        %v1373 = vmax.f32 %v1240, 0.0
        %v1374 = vmax.f32 %v1242, 0.0
        %v1375 = vmax.f32 %v1245, 0.0
        %v1376 = vmax.f32 %v1247, 0.0
        %v1377 = vadd.f32 %v1249, %v1250
        %v1378 = vadd.f32 %v1377, %v1251
        %v1379 = vadd.f32 %v1378, %v1252
        %v1380 = vadd.f32 %v1379, %v1253
        %v1381 = vadd.f32 %v1380, %v1254
        %v1382 = vadd.f32 %v1381, %v1255
        %v1383 = vadd.f32 %v1382, %v1256
        %v1384 = vadd.f32 %v1383, %v1257
        %v1385 = vadd.f32 %v1384, %v1258
        %v1386 = vadd.f32 %v1385, %v1259
        %v1387 = vadd.f32 %v1386, %v1260
        %v1388 = vadd.f32 %v1387, %v1261
        %v1389 = vadd.f32 %v1388, %v1262
        %v1390 = vadd.f32 %v1389, %v1263
        %v1391 = vadd.f32 %v1390, %v1264
        %v1392 = vadd.f32 %v1391, %v1265
        %v1393 = vadd.f32 %v1392, %v1266
        %v1394 = vadd.f32 %v1393, %v1267
        %v1395 = vadd.f32 %v1394, %v1268
        %v1396 = vadd.f32 %v1395, %v1269
        %v1397 = vadd.f32 %v1396, %v1270
        %v1398 = vadd.f32 %v1397, %v1271
        %v1399 = vadd.f32 %v1398, %v1272
        %v1400 = vadd.f32 %v1399, %v1273
        %v1401 = vadd.f32 %v1400, %v1274
        %v1402 = vadd.f32 %v1401, %v1275
        %v1403 = vadd.f32 %v1402, %v1276
        %v1404 = vadd.f32 %v1403, %v1277
        %v1405 = vadd.f32 %v1404, %v1278
        %v1406 = vadd.f32 %v1405, %v1279
        %v1407 = vadd.f32 %v1406, %v1280
        %v1408 = vadd.f32 %v1407, %v1281
        %v1409 = vadd.f32 %v1408, %v1282
        %v1410 = vadd.f32 %v1409, %v1283
        %v1411 = vadd.f32 %v1410, %v1284
        %v1412 = vadd.f32 %v1411, %v1285
        %v1413 = vadd.f32 %v1412, %v1286
        %v1414 = vadd.f32 %v1413, %v1287
        %v1415 = vadd.f32 %v1414, %v1288
        %v1416 = vadd.f32 %v1415, %v1289
        %v1417 = vadd.f32 %v1416, %v1290
        %v1418 = vadd.f32 %v1417, %v1291
        %v1419 = vadd.f32 %v1418, %v1292
        %v1420 = vadd.f32 %v1419, %v1293
        %v1421 = vadd.f32 %v1420, %v1294
        %v1422 = vadd.f32 %v1421, %v1295
        %v1423 = vadd.f32 %v1422, %v1296
        %v1424 = vadd.f32 %v1423, %v1297
        %v1425 = vadd.f32 %v1424, %v1298
        %v1426 = vadd.f32 %v1425, %v1299
        %v1427 = vadd.f32 %v1426, %v1300
        %v1428 = vadd.f32 %v1427, %v1301
        %v1429 = vadd.f32 %v1428, %v1302
        %v1430 = vadd.f32 %v1429, %v1303
        %v1431 = vadd.f32 %v1430, %v1304
        %v1432 = vadd.f32 %v1431, %v1305
        %v1433 = vadd.f32 %v1432, %v1306
        %v1434 = vadd.f32 %v1433, %v1307
        %v1435 = vadd.f32 %v1434, %v1308
        %v1436 = vadd.f32 %v1435, %v1309
        %v1437 = vadd.f32 %v1436, %v1310
        %v1438 = vadd.f32 %v1437, %v1311
        %v1439 = vadd.f32 %v1438, %v1312
        %v1440 = vadd.f32 %v1439, %v1313
        %v1441 = vadd.f32 %v1440, %v1314
        %v1442 = vadd.f32 %v1441, %v1315
        %v1443 = vadd.f32 %v1442, %v1316
        %v1444 = vadd.f32 %v1443, %v1317
        %v1445 = vadd.f32 %v1444, %v1318
        %v1446 = vadd.f32 %v1445, %v1319
        %v1447 = vadd.f32 %v1446, %v1320
        %v1448 = vadd.f32 %v1447, %v1321
        %v1449 = vadd.f32 %v1448, %v1322
        %v1450 = vadd.f32 %v1449, %v1323
        %v1451 = vadd.f32 %v1450, %v1324
        %v1452 = vadd.f32 %v1451, %v1325
        %v1453 = vadd.f32 %v1452, %v1326
        %v1454 = vadd.f32 %v1453, %v1327
        %v1455 = vadd.f32 %v1454, %v1328
        %v1456 = vadd.f32 %v1455, %v1329
        %v1457 = vadd.f32 %v1456, %v1330
        %v1458 = vadd.f32 %v1457, %v1331
        %v1459 = vadd.f32 %v1458, %v1332
        %v1460 = vadd.f32 %v1459, %v1333
        %v1461 = vadd.f32 %v1460, %v1334
        %v1462 = vadd.f32 %v1461, %v1335
        %v1463 = vadd.f32 %v1462, %v1336
        %v1464 = vadd.f32 %v1463, %v1337
        %v1465 = vadd.f32 %v1464, %v1338
        %v1466 = vadd.f32 %v1465, %v1339
        %v1467 = vadd.f32 %v1466, %v1340
        %v1468 = vadd.f32 %v1467, %v1341
        %v1469 = vadd.f32 %v1468, %v1342
        %v1470 = vadd.f32 %v1469, %v1343
        %v1471 = vadd.f32 %v1470, %v1344
        %v1472 = vadd.f32 %v1471, %v1345
        %v1473 = vadd.f32 %v1472, %v1346
        %v1474 = vadd.f32 %v1473, %v1347
        %v1475 = vadd.f32 %v1474, %v1348
        %v1476 = vadd.f32 %v1475, %v1349
        %v1477 = vadd.f32 %v1476, %v1350
        %v1478 = vadd.f32 %v1477, %v1351
        %v1479 = vadd.f32 %v1478, %v1352
        %v1480 = vadd.f32 %v1479, %v1353
        %v1481 = vadd.f32 %v1480, %v1354
        %v1482 = vadd.f32 %v1481, %v1355
        %v1483 = vadd.f32 %v1482, %v1356
        %v1484 = vadd.f32 %v1483, %v1357
        %v1485 = vadd.f32 %v1484, %v1358
        %v1486 = vadd.f32 %v1485, %v1359
        %v1487 = vadd.f32 %v1486, %v1360
        %v1488 = vadd.f32 %v1487, %v1361
        %v1489 = vadd.f32 %v1488, %v1362
        %v1490 = vadd.f32 %v1489, %v1363
        %v1491 = vadd.f32 %v1490, %v1364
        %v1492 = vadd.f32 %v1491, %v1365
        %v1493 = vadd.f32 %v1492, %v1366
        %v1494 = vadd.f32 %v1493, %v1367
        %v1495 = vadd.f32 %v1494, %v1368
        %v1496 = vadd.f32 %v1495, %v1369
        %v1497 = vadd.f32 %v1496, %v1370
        %v1498 = vadd.f32 %v1497, %v1371
        %v1499 = vadd.f32 %v1498, %v1372
        %v1500 = vadd.f32 %v1499, %v1373
        %v1501 = vadd.f32 %v1500, %v1374
        %v1502 = vadd.f32 %v1501, %v1375
        %v1503 = vadd.f32 %v1502, %v1376
        %v1504 = vrot.slane %v1503, 4
        %v1505 = vadd.f32 %v1503, %v1504
        %v1506 = vrot.slane %v1505, 2
        %v1507 = vadd.f32 %v1505, %v1506
        %v1508 = vrot.slane %v1507, 1
        %v1509 = vadd.f32 %v1507, %v1508
        %v1510 = vmul.f32 %v1509, 0.0009765625
        %v1511 = vpack.c.bf16 %v1510, %v1510
        %v1512 = vld [vmem:[%s3] sm:$0xf]
        %v1513 = vld [vmem:[%s3 + $0x4] sm:$0xf]
        %v1514 = vld [vmem:[%s3 + $0x8] sm:$0xf]
        %v1515 = vld [vmem:[%s3 + $0xc] sm:$0xf]
        %v1516 = vld [vmem:[%s3 + $0x10] sm:$0xf]
        %v1517 = vld [vmem:[%s3 + $0x14] sm:$0xf]
        %v1518 = vld [vmem:[%s3 + $0x18] sm:$0xf]
        %v1519 = vld [vmem:[%s3 + $0x1c] sm:$0xf]
        %v1520 = vld [vmem:[%s3 + $0x20] sm:$0xf]
        %v1521 = vld [vmem:[%s3 + $0x24] sm:$0xf]
        %v1522 = vld [vmem:[%s3 + $0x28] sm:$0xf]
        %v1523 = vld [vmem:[%s3 + $0x2c] sm:$0xf]
        %v1524 = vld [vmem:[%s3 + $0x30] sm:$0xf]
        %v1525 = vld [vmem:[%s3 + $0x34] sm:$0xf]
        %v1526 = vld [vmem:[%s3 + $0x38] sm:$0xf]
        %v1527 = vld [vmem:[%s3 + $0x3c] sm:$0xf]
        %v1528 = vld [vmem:[%s4] sm:$0x1]
        %v1545 = vunpack.c.l.b16 %v1512
        %v1546 = vunpack.c.l.b16 %v1513
        %v1547 = vunpack.c.l.b16 %v1514
        %v1548 = vunpack.c.l.b16 %v1515
        %v1549 = vunpack.c.l.b16 %v1516
        %v1550 = vunpack.c.l.b16 %v1517
        %v1551 = vunpack.c.l.b16 %v1518
        %v1552 = vunpack.c.l.b16 %v1519
        %v1553 = vunpack.c.l.b16 %v1520
        %v1554 = vunpack.c.l.b16 %v1521
        %v1555 = vunpack.c.l.b16 %v1522
        %v1556 = vunpack.c.l.b16 %v1523
        %v1557 = vunpack.c.l.b16 %v1524
        %v1558 = vunpack.c.l.b16 %v1525
        %v1559 = vunpack.c.l.b16 %v1526
        %v1560 = vunpack.c.l.b16 %v1527
        %v1561 = vpack.c.b16 %v1546, %v1545
        %v1562 = vpack.c.b16 %v1548, %v1547
        %v1563 = vpack.c.b16 %v1550, %v1549
        %v1564 = vpack.c.b16 %v1552, %v1551
        %v1565 = vpack.c.b16 %v1554, %v1553
        %v1566 = vpack.c.b16 %v1556, %v1555
        %v1567 = vpack.c.b16 %v1558, %v1557
        %v1568 = vpack.c.b16 %v1560, %v1559
        %1577 = vmatpush.bf16.msra.mxu0 %v1568
        %1578 = vmatpush.bf16.msra.mxu0 %v1567
        %1579 = vmatpush.bf16.msra.mxu0 %v1566
        %1580 = vmatpush.bf16.msra.mxu0 %v1565
        %1581 = vmatpush.bf16.msra.mxu0 %v1564
        %1582 = vmatpush.bf16.msra.mxu0 %v1563
        %1583 = vmatpush.bf16.msra.mxu0 %v1562
        %1584 = vmatpush.bf16.msra.mxu0 %v1561
        %1585 = vmatmul.bf16.gmra.mxu0 %v1511
        %v1586 = vpop.f32.mrf.mxu0
        %v1587 = vadd.f32 %v1528, %v1586
        %v1588 = vpop.f32.mrf.mxu0
        %1589 = vdwg.mxu0
        %1590 = vst [vmem:[%s217] sm:$0x1] %v1587
        %s1591 = sand.u32 %s137, 1
        %s1592 = scalar_lea.sflag [#allocation3], %s1591
        %s1593 = sand.u32 %s137, 1
        %s1594 = scalar_lea.vmem [#allocation2], %s1593
        // Predicated region
        $region41: #{a_call__.1} parent=39 // pred_check
          %p1595 = pneg %p147
        $region42: #{a_call__.1} parent=39 // pred_check_branch
          %1597 = sbr.rel (%p1595) target = $region44
        $region43: #{a_call__.1} parent=39 // pred_region
          %1599 = vsyncadd %s1592, 0
          %s1600 = scalar_lea.hbm %s5, %s19
          %s1602 = sshll.u32 %s1594, 4
          %s1603 = int_to_ptr.vmem [resolvable:$true] %s1602
          %s1604 = sshll.u32 %s1600, 4
          %s1605 = int_to_ptr.hbm [resolvable:$true] %s1604
          %1607 = dma.vmem_to_hbm [thread:$0]  %s1603, 16, %s1605, %s1592
        $region44: #{a_call__.1} parent=39 // pred_fallthru
          _
      $region40: #{a_call__.1} parent=5 // pred_fallthru
        _
      %p1608 = scmp.le.s32.totalorder 2, %s14
      // Predicated region
      $region45: #{a_call__.1} parent=5 // pred_check
        %p1609 = pneg %p1608
      $region46: #{a_call__.1} parent=5 // pred_check_branch
        %1611 = sbr.rel (%p1609) target = $region48
      $region47: #{a_call__.1} parent=5 // pred_region
        %s1612 = ssub.s32 %s14, 2
        // Predicated region
        $region49: #{a_call__.1} parent=47 // pred_check
          %p1613 = pneg %p153
        $region50: #{a_call__.1} parent=47 // pred_check_branch
          %1615 = sbr.rel (%p1613) target = $region52
        $region51: #{a_call__.1} parent=47 // pred_region
          %s1616 = sand.u32 %s138, 1
          %s1617 = scalar_lea.sflag [#allocation3], %s1616
          %s1618 = sand.u32 %s138, 1
          %s1619 = scalar_lea.vmem [#allocation2], %s1618
          %1621 = dma.done %s1617, 16
        $region52: #{a_call__.1} parent=47 // pred_fallthru
          _
      $region48: #{a_call__.1} parent=5 // pred_fallthru
        _
    $region6: #{a_call__.1} parent=1 // loop_footer
      %s18 = sadd.s32 1, %s14
    $region7: #{a_call__.1} parent=1 // loop_footer_branch
      %13 = sbr.rel target = $region3
    $region8: #{a_call__.1} parent=1 // loop_exit
      _
    %1622 = vsyncpa [#allocation3], 1
    %s1623 = scalar_lea.sflag [#allocation3], 1
    %1624 = vsyncpa %s1623, 1

</llo_original>
